<compile_context>
chip_gen: v7x
topology: tpu7x:2x2x1
jax: 0.10.0
libtpu: 0.0.40
codegen_flags: <defaults>
</compile_context>

<pallas_src>
import functools

import jax
import jax.numpy as jnp
from jax import lax
from jax.experimental import pallas as pl
from jax.experimental.pallas import tpu as pltpu


def _batchnorm1d_train(z, gamma=None, beta=None, eps=1e-5):
    """nn.BatchNorm1d in training mode: batch stats, biased variance."""
    mean = jnp.mean(z, axis=0, keepdims=True)
    var = jnp.mean((z - mean) ** 2, axis=0, keepdims=True)
    y = (z - mean) * jax.lax.rsqrt(var + eps)
    if gamma is not None:
        y = y * gamma + beta
    return y


# --------------------------------------------------------------------------- #
# Kernel 1: streaming backbone conv + ReLU + global-average-pool partial sums #
# --------------------------------------------------------------------------- #
def _stream_gap_kernel(x_ref, wct_ref, gap_ref, *,
                       n_batch, n_chan, hidden, tile_s, chunk,
                       tiles_per_par, s_total, needs_mask):
    """Grid: (n_par, tiles_per_par); ("parallel", "arbitrary").

    x_ref   : [B*C, TILE_S]   native-dtype spatial tile, lane-dense on S
    wct_ref : [hidden, C]     folded + transposed 1x1-conv weight (resident)
    gap_ref : [1, hidden, B]  per-parallel-block accumulator of post-ReLU sums
    """
    p = pl.program_id(0)
    j = pl.program_id(1)

    @pl.when(j == 0)
    def _init():
        gap_ref[...] = jnp.zeros_like(gap_ref)

    wct = wct_ref[...]                                   # [hidden, C] f32
    base = (p * tiles_per_par + j) * tile_s              # global spatial offset
    n_chunks = tile_s // chunk

    # Lane-index masks used to scatter each batch's column sum into the
    # [hidden, B] accumulator with pure VPU ops (no masked RMW stores).
    bcol = lax.broadcasted_iota(jnp.int32, (hidden, n_batch), 1)
    col_masks = [bcol == b for b in range(n_batch)]

    def chunk_body(c, carry):
        off = pl.multiple_of(c * chunk, chunk)
        if needs_mask:
            lane = lax.broadcasted_iota(jnp.int32, (1, chunk), 1)
            valid = (base + off + lane) < s_total
        for b in range(n_batch):
            xc = x_ref[pl.ds(b * n_chan, n_chan), pl.ds(off, chunk)]
            xc = xc.astype(jnp.float32)                  # .float() after the DMA
            if needs_mask:
                xc = jnp.where(valid, xc, 0.0)           # zero padded tail lanes
            hb = jnp.dot(wct, xc, preferred_element_type=jnp.float32)  # [hidden, chunk]
            hb = jnp.maximum(hb, 0.0)                    # backbone ReLU
            colsum = jnp.sum(hb, axis=1, keepdims=True)  # [hidden, 1] GAP partial
            carry = carry + jnp.where(col_masks[b], colsum, 0.0)
        return carry

    tile_sum = lax.fori_loop(
        0, n_chunks, chunk_body,
        jnp.zeros((hidden, n_batch), jnp.float32),
        unroll=(n_chunks <= 8))

    gap_ref[...] += tile_sum[None]                       # one dense accumulate / step


# --------------------------------------------------------------------------- #
# Kernel 2: tiny head (GAP divide + fc MLP + predictor), whole-array VMEM      #
# --------------------------------------------------------------------------- #
def _head_kernel(gap_ref, w1_ref, g1_ref, b1_ref, w2_ref,
                 w3_ref, g3_ref, b3_ref, w4_ref, out_ref, *, s_total):
    sums = jnp.sum(gap_ref[...], axis=0)                 # combine per-core partials
    feat = sums.T * (1.0 / s_total)                      # [B, hidden] global avg pool

    # base_encoder.fc: Linear -> BN(affine) -> ReLU -> Linear -> BN(no affine)
    z = jnp.dot(feat, w1_ref[...], preferred_element_type=jnp.float32)
    z = _batchnorm1d_train(z, g1_ref[...], b1_ref[...])
    z = jnp.maximum(z, 0.0)
    z = jnp.dot(z, w2_ref[...], preferred_element_type=jnp.float32)
    z = _batchnorm1d_train(z)                            # affine=False

    # predictor: Linear -> BN(affine) -> ReLU -> Linear
    q = jnp.dot(z, w3_ref[...], preferred_element_type=jnp.float32)
    q = _batchnorm1d_train(q, g3_ref[...], b3_ref[...])
    q = jnp.maximum(q, 0.0)
    out_ref[...] = jnp.dot(q, w4_ref[...], preferred_element_type=jnp.float32)


# --------------------------------------------------------------------------- #
# Wrapper                                                                      #
# --------------------------------------------------------------------------- #
def _pick_tile_s(s, row_bytes):
    """Largest lane-aligned tile under a per-buffer VMEM budget.  Prefers exact
    divisors of S; otherwise the tail tile is masked in-kernel (cdiv grid)."""
    budget = 8 * 1024 * 1024                     # per-buffer; x2 for double buffer
    if s <= 128:
        return s                                 # full-extent block (always legal)
    cands = [t for t in (32768, 16384, 8192, 4096, 2048, 1024, 512, 256, 128)
             if t * row_bytes <= budget] or [128]
    for t in cands:
        if s % t == 0:
            return t
    for t in cands:
        if t <= s:
            return t                             # masked tail handles the remainder
    return cands[-1]


def _vmem_limit_bytes():
    """Generation-aware scoped-VMEM limit (v5e/v6e: ~96 MiB, v7x: ~48 MiB)."""
    try:
        cap = pltpu.get_tpu_info().vmem_capacity_bytes
    except Exception:
        cap = 64 * 1024 * 1024
    return int(cap) * 3 // 4


def moco_v3_inference(x, params):
    """x: NCHW array [B, C, H, W] (any float/int dtype). Returns logits [B, dim]."""
    B, C, H, W = x.shape
    S = H * W

    # Fold cat([x,x,x],1) into the 1x1-conv weight instead of materializing 3x data.
    wc = params['w_conv']                                  # [3C, hidden]
    wc_eff = wc[0:C] + wc[C:2 * C] + wc[2 * C:3 * C]       # [C, hidden]
    wct = wc_eff.T                                         # [hidden, C]
    hidden = wct.shape[0]
    dim = params['w4'].shape[1]

    # Stream x in its native dtype as one dense [B*C, S] slab (free reshape of NCHW).
    x2d = x.reshape(B * C, S)

    itemsize = jnp.dtype(x.dtype).itemsize
    tile_s = _pick_tile_s(S, B * C * itemsize)
    chunk = min(512, tile_s)
    n_tiles = pl.cdiv(S, tile_s)
    n_par = 2 if n_tiles >= 2 else 1                       # both TCs on v7x
    tiles_per_par = pl.cdiv(n_tiles, n_par)
    needs_mask = (n_par * tiles_per_par * tile_s != S)

    def x_index(p, j):
        t = p * tiles_per_par + j
        return (0, jnp.minimum(t, n_tiles - 1))            # clamp phantom tail steps

    vmem_limit = _vmem_limit_bytes()

    gap = pl.pallas_call(
        functools.partial(
            _stream_gap_kernel, n_batch=B, n_chan=C, hidden=hidden,
            tile_s=tile_s, chunk=chunk, tiles_per_par=tiles_per_par,
            s_total=S, needs_mask=needs_mask),
        out_shape=jax.ShapeDtypeStruct((n_par, hidden, B), jnp.float32),
        grid=(n_par, tiles_per_par),
        in_specs=[
            pl.BlockSpec((B * C, tile_s), x_index),              # streamed x
            pl.BlockSpec((hidden, C), lambda p, j: (0, 0)),      # resident conv weight
        ],
        out_specs=pl.BlockSpec((1, hidden, B), lambda p, j: (p, 0, 0)),
        compiler_params=pltpu.CompilerParams(
            dimension_semantics=("parallel", "arbitrary"),
            vmem_limit_bytes=vmem_limit,
        ),
    )(x2d, wct)

    # Tiny head in a separate no-grid kernel: whole-array VMEM operands,
    # single-buffered (keeps resident weights within v7x's 64 MiB VMEM).
    out = pl.pallas_call(
        functools.partial(_head_kernel, s_total=float(S)),
        out_shape=jax.ShapeDtypeStruct((B, dim), jnp.float32),
        compiler_params=pltpu.CompilerParams(vmem_limit_bytes=vmem_limit),
    )(gap, params['w1'], params['g1'], params['b1'], params['w2'],
      params['w3'], params['g3'], params['b3'], params['w4'])
    return out


# --------------------------------------------------------------------------- #
# Pure-JAX reference (literal module semantics)                                #
# --------------------------------------------------------------------------- #
def moco_v3_reference(x, params):
    B, C, H, W = x.shape
    xcat = jnp.concatenate([x, x, x], axis=1).astype(jnp.float32)
    x_bsc = jnp.transpose(xcat, (0, 2, 3, 1)).reshape(B, H * W, 3 * C)
    h = jnp.maximum(jnp.einsum('bsc,ch->bsh', x_bsc, params['w_conv']), 0.0)
    feat = jnp.mean(h, axis=1)
    z = feat @ params['w1']
    z = _batchnorm1d_train(z, params['g1'], params['b1'])
    z = jnp.maximum(z, 0.0)
    z = z @ params['w2']
    z = _batchnorm1d_train(z)
    p = z @ params['w3']
    p = _batchnorm1d_train(p, params['g3'], params['b3'])
    p = jnp.maximum(p, 0.0)
    return p @ params['w4']


def init_params(key, in_channels, hidden_dim, mlp_dim, dim):
    """Deterministic synthetic parameters (weights stored as (in, out))."""
    ks = jax.random.split(key, 5)
    cin = 3 * in_channels
    return {
        'w_conv': 0.05 * jax.random.normal(ks[0], (cin, hidden_dim), jnp.float32),
        'w1': 0.05 * jax.random.normal(ks[1], (hidden_dim, mlp_dim), jnp.float32),
        'g1': jnp.ones((1, mlp_dim), jnp.float32),
        'b1': jnp.zeros((1, mlp_dim), jnp.float32),
        'w2': 0.05 * jax.random.normal(ks[2], (mlp_dim, dim), jnp.float32),
        'w3': 0.05 * jax.random.normal(ks[3], (dim, mlp_dim), jnp.float32),
        'g3': jnp.ones((1, mlp_dim), jnp.float32),
        'b3': jnp.zeros((1, mlp_dim), jnp.float32),
        'w4': 0.05 * jax.random.normal(ks[4], (mlp_dim, dim), jnp.float32),
    }


if __name__ == "__main__":
    B, C, H, W = 2, 4, 16, 16
    hidden_dim, mlp_dim, dim = 32, 64, 16

    key = jax.random.PRNGKey(0)
    k_x, k_p = jax.random.split(key)
    x = jax.random.normal(k_x, (B, C, H, W), jnp.float32)
    params = init_params(k_p, C, hidden_dim, mlp_dim, dim)

    logits = jax.jit(moco_v3_inference)(x, params)
    logits = jax.block_until_ready(logits)
    assert logits.shape == (B, dim) and logits.dtype == jnp.float32

    ref = jax.block_until_ready(jax.jit(moco_v3_reference)(x, params))
    import numpy as np
    np.testing.assert_allclose(np.asarray(logits), np.asarray(ref),
                               rtol=2e-2, atol=2e-2)
    print("KERNEL_OK")
</pallas_src>

<mosaic_0001>
module attributes {stable_mosaic.version = 11 : i64} {
  func.func @_stream_gap_kernel(%arg0: i32, %arg1: i32, %arg2: memref<8x256xf32, #tpu.memory_space<vmem>>, %arg3: memref<32x4xf32, #tpu.memory_space<vmem>>, %arg4: memref<1x32x2xf32, #tpu.memory_space<vmem>>) attributes {dimension_semantics = [#tpu.dimension_semantics<parallel>, #tpu.dimension_semantics<arbitrary>], iteration_bounds = array<i64: 1, 1>, scalar_prefetch = 0 : i64, scratch_operands = 0 : i64, tpu.core_type = #tpu.core_type<tc>, window_params = [{transform_indices = @transform_0, window_bounds = array<i64: 8, 256>}, {pipeline_mode = #tpu.pipeline_mode<synchronous>, transform_indices = @transform_1, window_bounds = array<i64: 32, 4>}, {transform_indices = @transform_2, window_bounds = array<i64: 1, 32, 2>}]} {
    %c0_i32 = arith.constant 0 : i32
    %0 = arith.cmpi eq, %arg1, %c0_i32 : i32
    %1 = arith.extui %0 : i1 to i32
    %c0_i32_0 = arith.constant 0 : i32
    %2 = arith.cmpi ne, %1, %c0_i32_0 : i32
    scf.if %2 {
      %cst_20 = arith.constant 0.000000e+00 : f32
      %40 = vector.broadcast %cst_20 : f32 to vector<1x32x2xf32>
      %c0_21 = arith.constant 0 : index
      %c0_22 = arith.constant 0 : index
      %c0_23 = arith.constant 0 : index
      %41 = vector.load %arg4[%c0_21, %c0_22, %c0_23] : memref<1x32x2xf32, #tpu.memory_space<vmem>>, vector<1x32x2xf32>
      tpu.vector_store %arg4[%c0_21, %c0_22, %c0_23], %40 {strides = array<i32>} : memref<1x32x2xf32, #tpu.memory_space<vmem>>, vector<1x32x2xf32>,
    } else {
    }
    %c0 = arith.constant 0 : index
    %c0_1 = arith.constant 0 : index
    %3 = vector.load %arg3[%c0, %c0_1] : memref<32x4xf32, #tpu.memory_space<vmem>>, vector<32x4xf32>
    %4 = tpu.iota {dimensions = array<i32: 1>} : vector<32x2xi32>
    %c0_i32_2 = arith.constant 0 : i32
    %5 = vector.broadcast %c0_i32_2 : i32 to vector<32x2xi32>
    %6 = arith.cmpi eq, %4, %5 : vector<32x2xi32>
    %c1_i32 = arith.constant 1 : i32
    %7 = vector.broadcast %c1_i32 : i32 to vector<32x2xi32>
    %8 = arith.cmpi eq, %4, %7 : vector<32x2xi32>
    %cst = arith.constant 0.000000e+00 : f32
    %9 = vector.broadcast %cst : f32 to vector<32x2xf32>
    %c0_i32_3 = arith.constant 0 : i32
    %c256_i32 = arith.constant 256 : i32
    %10 = arith.muli %c0_i32_3, %c256_i32 : i32
    %11 = tpu.assume_multiple %10, 256 : i32
    %c0_4 = arith.constant 0 : index
    %12 = arith.index_cast %11 : i32 to index
    %13 = vector.load %arg2[%c0_4, %12] : memref<8x256xf32, #tpu.memory_space<vmem>>, vector<4x256xf32>
    %cst_5 = arith.constant dense<0.000000e+00> : vector<32x256xf32>
    %14 = tpu.matmul %3, %13, %cst_5 {dimension_numbers = #tpu.dot_dimension_numbers<[1], [0], [0], [1], [0, 0, 1, 1], [], []>} : vector<32x4xf32>, vector<4x256xf32>, vector<32x256xf32> -> vector<32x256xf32>
    %cst_6 = arith.constant 0.000000e+00 : f32
    %15 = vector.broadcast %cst_6 : f32 to vector<32x256xf32>
    %16 = arith.maximumf %14, %15 : vector<32x256xf32>
    %cst_7 = arith.constant dense<0.000000e+00> : vector<32xf32>
    %17 = vector.multi_reduction <add>, %16, %cst_7 [1] : vector<32x256xf32> to vector<32xf32>
    %18 = vector.shape_cast %17 : vector<32xf32> to vector<32x1xf32>
    %cst_8 = arith.constant 0.000000e+00 : f32
    %19 = vector.shape_cast %18 : vector<32x1xf32> to vector<32x1xf32>
    %20 = vector.broadcast %19 : vector<32x1xf32> to vector<32x2xf32>
    %21 = vector.broadcast %cst_8 : f32 to vector<32x2xf32>
    %22 = arith.select %6, %20, %21 : vector<32x2xi1>, vector<32x2xf32>
    %23 = arith.addf %9, %22 : vector<32x2xf32>
    %c4 = arith.constant 4 : index
    %24 = arith.index_cast %11 : i32 to index
    %25 = vector.load %arg2[%c4, %24] : memref<8x256xf32, #tpu.memory_space<vmem>>, vector<4x256xf32>
    %cst_9 = arith.constant dense<0.000000e+00> : vector<32x256xf32>
    %26 = tpu.matmul %3, %25, %cst_9 {dimension_numbers = #tpu.dot_dimension_numbers<[1], [0], [0], [1], [0, 0, 1, 1], [], []>} : vector<32x4xf32>, vector<4x256xf32>, vector<32x256xf32> -> vector<32x256xf32>
    %cst_10 = arith.constant 0.000000e+00 : f32
    %27 = vector.broadcast %cst_10 : f32 to vector<32x256xf32>
    %28 = arith.maximumf %26, %27 : vector<32x256xf32>
    %cst_11 = arith.constant dense<0.000000e+00> : vector<32xf32>
    %29 = vector.multi_reduction <add>, %28, %cst_11 [1] : vector<32x256xf32> to vector<32xf32>
    %30 = vector.shape_cast %29 : vector<32xf32> to vector<32x1xf32>
    %cst_12 = arith.constant 0.000000e+00 : f32
    %31 = vector.shape_cast %30 : vector<32x1xf32> to vector<32x1xf32>
    %32 = vector.broadcast %31 : vector<32x1xf32> to vector<32x2xf32>
    %33 = vector.broadcast %cst_12 : f32 to vector<32x2xf32>
    %34 = arith.select %8, %32, %33 : vector<32x2xi1>, vector<32x2xf32>
    %35 = arith.addf %23, %34 : vector<32x2xf32>
    %c1_i32_13 = arith.constant 1 : i32
    %c0_14 = arith.constant 0 : index
    %c0_15 = arith.constant 0 : index
    %c0_16 = arith.constant 0 : index
    %36 = vector.load %arg4[%c0_14, %c0_15, %c0_16] : memref<1x32x2xf32, #tpu.memory_space<vmem>>, vector<1x32x2xf32>
    %37 = vector.shape_cast %35 : vector<32x2xf32> to vector<1x32x2xf32>
    %38 = arith.addf %36, %37 : vector<1x32x2xf32>
    %c0_17 = arith.constant 0 : index
    %c0_18 = arith.constant 0 : index
    %c0_19 = arith.constant 0 : index
    %39 = vector.load %arg4[%c0_17, %c0_18, %c0_19] : memref<1x32x2xf32, #tpu.memory_space<vmem>>, vector<1x32x2xf32>
    tpu.vector_store %arg4[%c0_17, %c0_18, %c0_19], %38 {strides = array<i32>} : memref<1x32x2xf32, #tpu.memory_space<vmem>>, vector<1x32x2xf32>,
    return
  }
  func.func @transform_0(%arg0: i32, %arg1: i32) -> (i32, i32) {
    %c1_i32 = arith.constant 1 : i32
    %0 = arith.muli %arg0, %c1_i32 : i32
    %1 = arith.addi %0, %arg1 : i32
    %c0_i32 = arith.constant 0 : i32
    %2 = arith.minsi %1, %c0_i32 : i32
    %c0_i32_0 = arith.constant 0 : i32
    %c0_i32_1 = arith.constant 0 : i32
    return %c0_i32_0, %2 : i32, i32
  }
  func.func @transform_1(%arg0: i32, %arg1: i32) -> (i32, i32) {
    %c0_i32 = arith.constant 0 : i32
    %c0_i32_0 = arith.constant 0 : i32
    %c0_i32_1 = arith.constant 0 : i32
    return %c0_i32, %c0_i32_0 : i32, i32
  }
  func.func @transform_2(%arg0: i32, %arg1: i32) -> (i32, i32, i32) {
    %c0_i32 = arith.constant 0 : i32
    %c0_i32_0 = arith.constant 0 : i32
    %c0_i32_1 = arith.constant 0 : i32
    return %arg0, %c0_i32, %c0_i32_0 : i32, i32, i32
  }
}

module attributes {stable_mosaic.version = 11 : i64} {
  func.func @_head_kernel(%arg0: memref<1x32x2xf32, #tpu.memory_space<vmem>>, %arg1: memref<32x64xf32, #tpu.memory_space<vmem>>, %arg2: memref<1x64xf32, #tpu.memory_space<vmem>>, %arg3: memref<1x64xf32, #tpu.memory_space<vmem>>, %arg4: memref<64x16xf32, #tpu.memory_space<vmem>>, %arg5: memref<16x64xf32, #tpu.memory_space<vmem>>, %arg6: memref<1x64xf32, #tpu.memory_space<vmem>>, %arg7: memref<1x64xf32, #tpu.memory_space<vmem>>, %arg8: memref<64x16xf32, #tpu.memory_space<vmem>>, %arg9: memref<2x16xf32, #tpu.memory_space<vmem>>) attributes {dimension_semantics = [], scalar_prefetch = 0 : i64, scratch_operands = 0 : i64, tpu.core_type = #tpu.core_type<tc>} {
    %c0 = arith.constant 0 : index
    %c0_0 = arith.constant 0 : index
    %c0_1 = arith.constant 0 : index
    %0 = vector.load %arg0[%c0, %c0_0, %c0_1] : memref<1x32x2xf32, #tpu.memory_space<vmem>>, vector<1x32x2xf32>
    %cst = arith.constant dense<0.000000e+00> : vector<32x2xf32>
    %1 = vector.multi_reduction <add>, %0, %cst [0] : vector<1x32x2xf32> to vector<32x2xf32>
    %2 = tpu.transpose %1, [1, 0] : vector<32x2xf32> -> vector<2x32xf32>
    %cst_2 = arith.constant 3.906250e-03 : f32
    %3 = vector.broadcast %cst_2 : f32 to vector<2x32xf32>
    %4 = arith.mulf %2, %3 : vector<2x32xf32>
    %c0_3 = arith.constant 0 : index
    %c0_4 = arith.constant 0 : index
    %5 = vector.load %arg1[%c0_3, %c0_4] : memref<32x64xf32, #tpu.memory_space<vmem>>, vector<32x64xf32>
    %cst_5 = arith.constant dense<0.000000e+00> : vector<2x64xf32>
    %6 = tpu.matmul %4, %5, %cst_5 {dimension_numbers = #tpu.dot_dimension_numbers<[1], [0], [0], [1], [0, 0, 1, 1], [], []>} : vector<2x32xf32>, vector<32x64xf32>, vector<2x64xf32> -> vector<2x64xf32>
    %c0_6 = arith.constant 0 : index
    %c0_7 = arith.constant 0 : index
    %7 = vector.load %arg2[%c0_6, %c0_7] : memref<1x64xf32, #tpu.memory_space<vmem>>, vector<1x64xf32>
    %c0_8 = arith.constant 0 : index
    %c0_9 = arith.constant 0 : index
    %8 = vector.load %arg3[%c0_8, %c0_9] : memref<1x64xf32, #tpu.memory_space<vmem>>, vector<1x64xf32>
    %cst_10 = arith.constant dense<0.000000e+00> : vector<64xf32>
    %9 = vector.multi_reduction <add>, %6, %cst_10 [0] : vector<2x64xf32> to vector<64xf32>
    %10 = vector.shape_cast %9 : vector<64xf32> to vector<1x64xf32>
    %cst_11 = arith.constant 2.000000e+00 : f32
    %11 = vector.broadcast %cst_11 : f32 to vector<1x64xf32>
    %12 = arith.divf %10, %11 : vector<1x64xf32>
    %13 = vector.broadcast %12 : vector<1x64xf32> to vector<2x64xf32>
    %14 = arith.subf %6, %13 : vector<2x64xf32>
    %15 = arith.mulf %14, %14 : vector<2x64xf32>
    %cst_12 = arith.constant dense<0.000000e+00> : vector<64xf32>
    %16 = vector.multi_reduction <add>, %15, %cst_12 [0] : vector<2x64xf32> to vector<64xf32>
    %17 = vector.shape_cast %16 : vector<64xf32> to vector<1x64xf32>
    %cst_13 = arith.constant 2.000000e+00 : f32
    %18 = vector.broadcast %cst_13 : f32 to vector<1x64xf32>
    %19 = arith.divf %17, %18 : vector<1x64xf32>
    %20 = vector.broadcast %12 : vector<1x64xf32> to vector<2x64xf32>
    %21 = arith.subf %6, %20 : vector<2x64xf32>
    %cst_14 = arith.constant 9.99999974E-6 : f32
    %22 = vector.broadcast %cst_14 : f32 to vector<1x64xf32>
    %23 = arith.addf %19, %22 : vector<1x64xf32>
    %24 = math.rsqrt %23 : vector<1x64xf32>
    %25 = vector.broadcast %24 : vector<1x64xf32> to vector<2x64xf32>
    %26 = arith.mulf %21, %25 : vector<2x64xf32>
    %27 = vector.broadcast %7 : vector<1x64xf32> to vector<2x64xf32>
    %28 = arith.mulf %26, %27 : vector<2x64xf32>
    %29 = vector.broadcast %8 : vector<1x64xf32> to vector<2x64xf32>
    %30 = arith.addf %28, %29 : vector<2x64xf32>
    %cst_15 = arith.constant 0.000000e+00 : f32
    %31 = vector.broadcast %cst_15 : f32 to vector<2x64xf32>
    %32 = arith.maximumf %30, %31 : vector<2x64xf32>
    %c0_16 = arith.constant 0 : index
    %c0_17 = arith.constant 0 : index
    %33 = vector.load %arg4[%c0_16, %c0_17] : memref<64x16xf32, #tpu.memory_space<vmem>>, vector<64x16xf32>
    %cst_18 = arith.constant dense<0.000000e+00> : vector<2x16xf32>
    %34 = tpu.matmul %32, %33, %cst_18 {dimension_numbers = #tpu.dot_dimension_numbers<[1], [0], [0], [1], [0, 0, 1, 1], [], []>} : vector<2x64xf32>, vector<64x16xf32>, vector<2x16xf32> -> vector<2x16xf32>
    %cst_19 = arith.constant dense<0.000000e+00> : vector<16xf32>
    %35 = vector.multi_reduction <add>, %34, %cst_19 [0] : vector<2x16xf32> to vector<16xf32>
    %36 = vector.shape_cast %35 : vector<16xf32> to vector<1x16xf32>
    %cst_20 = arith.constant 2.000000e+00 : f32
    %37 = vector.broadcast %cst_20 : f32 to vector<1x16xf32>
    %38 = arith.divf %36, %37 : vector<1x16xf32>
    %39 = vector.broadcast %38 : vector<1x16xf32> to vector<2x16xf32>
    %40 = arith.subf %34, %39 : vector<2x16xf32>
    %41 = arith.mulf %40, %40 : vector<2x16xf32>
    %cst_21 = arith.constant dense<0.000000e+00> : vector<16xf32>
    %42 = vector.multi_reduction <add>, %41, %cst_21 [0] : vector<2x16xf32> to vector<16xf32>
    %43 = vector.shape_cast %42 : vector<16xf32> to vector<1x16xf32>
    %cst_22 = arith.constant 2.000000e+00 : f32
    %44 = vector.broadcast %cst_22 : f32 to vector<1x16xf32>
    %45 = arith.divf %43, %44 : vector<1x16xf32>
    %46 = vector.broadcast %38 : vector<1x16xf32> to vector<2x16xf32>
    %47 = arith.subf %34, %46 : vector<2x16xf32>
    %cst_23 = arith.constant 9.99999974E-6 : f32
    %48 = vector.broadcast %cst_23 : f32 to vector<1x16xf32>
    %49 = arith.addf %45, %48 : vector<1x16xf32>
    %50 = math.rsqrt %49 : vector<1x16xf32>
    %51 = vector.broadcast %50 : vector<1x16xf32> to vector<2x16xf32>
    %52 = arith.mulf %47, %51 : vector<2x16xf32>
    %c0_24 = arith.constant 0 : index
    %c0_25 = arith.constant 0 : index
    %53 = vector.load %arg5[%c0_24, %c0_25] : memref<16x64xf32, #tpu.memory_space<vmem>>, vector<16x64xf32>
    %cst_26 = arith.constant dense<0.000000e+00> : vector<2x64xf32>
    %54 = tpu.matmul %52, %53, %cst_26 {dimension_numbers = #tpu.dot_dimension_numbers<[1], [0], [0], [1], [0, 0, 1, 1], [], []>} : vector<2x16xf32>, vector<16x64xf32>, vector<2x64xf32> -> vector<2x64xf32>
    %c0_27 = arith.constant 0 : index
    %c0_28 = arith.constant 0 : index
    %55 = vector.load %arg6[%c0_27, %c0_28] : memref<1x64xf32, #tpu.memory_space<vmem>>, vector<1x64xf32>
    %c0_29 = arith.constant 0 : index
    %c0_30 = arith.constant 0 : index
    %56 = vector.load %arg7[%c0_29, %c0_30] : memref<1x64xf32, #tpu.memory_space<vmem>>, vector<1x64xf32>
    %cst_31 = arith.constant dense<0.000000e+00> : vector<64xf32>
    %57 = vector.multi_reduction <add>, %54, %cst_31 [0] : vector<2x64xf32> to vector<64xf32>
    %58 = vector.shape_cast %57 : vector<64xf32> to vector<1x64xf32>
    %cst_32 = arith.constant 2.000000e+00 : f32
    %59 = vector.broadcast %cst_32 : f32 to vector<1x64xf32>
    %60 = arith.divf %58, %59 : vector<1x64xf32>
    %61 = vector.broadcast %60 : vector<1x64xf32> to vector<2x64xf32>
    %62 = arith.subf %54, %61 : vector<2x64xf32>
    %63 = arith.mulf %62, %62 : vector<2x64xf32>
    %cst_33 = arith.constant dense<0.000000e+00> : vector<64xf32>
    %64 = vector.multi_reduction <add>, %63, %cst_33 [0] : vector<2x64xf32> to vector<64xf32>
    %65 = vector.shape_cast %64 : vector<64xf32> to vector<1x64xf32>
    %cst_34 = arith.constant 2.000000e+00 : f32
    %66 = vector.broadcast %cst_34 : f32 to vector<1x64xf32>
    %67 = arith.divf %65, %66 : vector<1x64xf32>
    %68 = vector.broadcast %60 : vector<1x64xf32> to vector<2x64xf32>
    %69 = arith.subf %54, %68 : vector<2x64xf32>
    %cst_35 = arith.constant 9.99999974E-6 : f32
    %70 = vector.broadcast %cst_35 : f32 to vector<1x64xf32>
    %71 = arith.addf %67, %70 : vector<1x64xf32>
    %72 = math.rsqrt %71 : vector<1x64xf32>
    %73 = vector.broadcast %72 : vector<1x64xf32> to vector<2x64xf32>
    %74 = arith.mulf %69, %73 : vector<2x64xf32>
    %75 = vector.broadcast %55 : vector<1x64xf32> to vector<2x64xf32>
    %76 = arith.mulf %74, %75 : vector<2x64xf32>
    %77 = vector.broadcast %56 : vector<1x64xf32> to vector<2x64xf32>
    %78 = arith.addf %76, %77 : vector<2x64xf32>
    %cst_36 = arith.constant 0.000000e+00 : f32
    %79 = vector.broadcast %cst_36 : f32 to vector<2x64xf32>
    %80 = arith.maximumf %78, %79 : vector<2x64xf32>
    %c0_37 = arith.constant 0 : index
    %c0_38 = arith.constant 0 : index
    %81 = vector.load %arg8[%c0_37, %c0_38] : memref<64x16xf32, #tpu.memory_space<vmem>>, vector<64x16xf32>
    %cst_39 = arith.constant dense<0.000000e+00> : vector<2x16xf32>
    %82 = tpu.matmul %80, %81, %cst_39 {dimension_numbers = #tpu.dot_dimension_numbers<[1], [0], [0], [1], [0, 0, 1, 1], [], []>} : vector<2x64xf32>, vector<64x16xf32>, vector<2x16xf32> -> vector<2x16xf32>
    %c0_40 = arith.constant 0 : index
    %c0_41 = arith.constant 0 : index
    %83 = vector.load %arg9[%c0_40, %c0_41] : memref<2x16xf32, #tpu.memory_space<vmem>>, vector<2x16xf32>
    tpu.vector_store %arg9[%c0_40, %c0_41], %82 {strides = array<i32>} : memref<2x16xf32, #tpu.memory_space<vmem>>, vector<2x16xf32>,
    return
  }
}

</mosaic_0001>

<llo_original>
// kernel: moco_v3_inference.3
$region0: #{moco_v3_inference.3}
  #allocation0 [shape = 'u32[]', space=smem, size = 0x4, offset = 0x4, fixed_abs, tag = 'smem constant byte address 0x4 - core index']
  #allocation1 [shape = 'u32[144,128]{1,0:T(1,128)}', space=vmem, size = 0x12000, scoped, tag = 'internal scratch']
  %s0 = inlined_call_operand.vmem [shape: f32[1,32,2], index: 0, kind: input, shape index: {}]
  %s1 = inlined_call_operand.vmem [shape: f32[32,64], index: 1, kind: input, shape index: {}]
  %s2 = inlined_call_operand.vmem [shape: f32[1,64], index: 2, kind: input, shape index: {}]
  %s3 = inlined_call_operand.vmem [shape: f32[1,64], index: 3, kind: input, shape index: {}]
  %s4 = inlined_call_operand.vmem [shape: f32[64,16], index: 4, kind: input, shape index: {}]
  %s5 = inlined_call_operand.vmem [shape: f32[16,64], index: 5, kind: input, shape index: {}]
  %s6 = inlined_call_operand.vmem [shape: f32[1,64], index: 6, kind: input, shape index: {}]
  %s7 = inlined_call_operand.vmem [shape: f32[1,64], index: 7, kind: input, shape index: {}]
  %s8 = inlined_call_operand.vmem [shape: f32[64,16], index: 8, kind: input, shape index: {}]
  %s9 = inlined_call_operand.hbm [shape: f32[2,16], index: 9, kind: output, shape index: {}]
  %s10 = sld [smem:[#allocation0]]
  $region46: #{moco_v3_inference.3} parent=0
    _
  %s12 = ssub.s32 1, %s10
  %s13 = scalar_select 0, %s12, %s10
  $region1: #{moco_v3_inference.3} parent=0
    #allocation2 [shape = 'u8[1024]{0}', space=vmem, size = 0x400, scoped, tag = 'output window, operand 0, single buffered']
    #allocation3 [shape = 's32[1]{0}', space=sflag, size = 0x4, scoped, tag = 'scoped memory for moco_v3_inference.3']
    %14 = vsyncpa [#allocation3], 0
    // Predicated region
    $region2: #{moco_v3_inference.3} parent=1 // pred_check
      _
    $region3: #{moco_v3_inference.3} parent=1 // pred_check_branch
      %16 = sbr.rel (0) target = $region5
    $region4: #{moco_v3_inference.3} parent=1 // pred_region
      _
    $region5: #{moco_v3_inference.3} parent=1 // pred_fallthru
      _
    // Predicated region
    $region6: #{moco_v3_inference.3} parent=1 // pred_check
      _
    $region7: #{moco_v3_inference.3} parent=1 // pred_check_branch
      %18 = sbr.rel (0) target = $region9
    $region8: #{moco_v3_inference.3} parent=1 // pred_region
      _
    $region9: #{moco_v3_inference.3} parent=1 // pred_fallthru
      _
    // Predicated region
    $region10: #{moco_v3_inference.3} parent=1 // pred_check
      _
    $region11: #{moco_v3_inference.3} parent=1 // pred_check_branch
      %20 = sbr.rel (0) target = $region13
    $region12: #{moco_v3_inference.3} parent=1 // pred_region
      _
    $region13: #{moco_v3_inference.3} parent=1 // pred_fallthru
      _
    // Predicated region
    $region14: #{moco_v3_inference.3} parent=1 // pred_check
      _
    $region15: #{moco_v3_inference.3} parent=1 // pred_check_branch
      %22 = sbr.rel (0) target = $region17
    $region16: #{moco_v3_inference.3} parent=1 // pred_region
      _
    $region17: #{moco_v3_inference.3} parent=1 // pred_fallthru
      _
    // Predicated region
    $region18: #{moco_v3_inference.3} parent=1 // pred_check
      _
    $region19: #{moco_v3_inference.3} parent=1 // pred_check_branch
      %24 = sbr.rel (0) target = $region21
    $region20: #{moco_v3_inference.3} parent=1 // pred_region
      _
    $region21: #{moco_v3_inference.3} parent=1 // pred_fallthru
      _
    // Predicated region
    $region22: #{moco_v3_inference.3} parent=1 // pred_check
      _
    $region23: #{moco_v3_inference.3} parent=1 // pred_check_branch
      %26 = sbr.rel (0) target = $region25
    $region24: #{moco_v3_inference.3} parent=1 // pred_region
      _
    $region25: #{moco_v3_inference.3} parent=1 // pred_fallthru
      _
    // Predicated region
    $region26: #{moco_v3_inference.3} parent=1 // pred_check
      _
    $region27: #{moco_v3_inference.3} parent=1 // pred_check_branch
      %28 = sbr.rel (0) target = $region29
    $region28: #{moco_v3_inference.3} parent=1 // pred_region
      _
    $region29: #{moco_v3_inference.3} parent=1 // pred_fallthru
      _
    // Predicated region
    $region30: #{moco_v3_inference.3} parent=1 // pred_check
      _
    $region31: #{moco_v3_inference.3} parent=1 // pred_check_branch
      %30 = sbr.rel (0) target = $region33
    $region32: #{moco_v3_inference.3} parent=1 // pred_region
      _
    $region33: #{moco_v3_inference.3} parent=1 // pred_fallthru
      _
    // Predicated region
    $region34: #{moco_v3_inference.3} parent=1 // pred_check
      _
    $region35: #{moco_v3_inference.3} parent=1 // pred_check_branch
      %32 = sbr.rel (0) target = $region37
    $region36: #{moco_v3_inference.3} parent=1 // pred_region
      _
    $region37: #{moco_v3_inference.3} parent=1 // pred_fallthru
      _
    %v33 = vld [vmem:[%s0] sm:$0xff]
    %v34 = vld [vmem:[%s0 + $0x8] sm:$0xff]
    %v35 = vld [vmem:[%s0 + $0x10] sm:$0xff]
    %v36 = vld [vmem:[%s0 + $0x18] sm:$0xff]
    %v37 = vadd.f32 %v33, 0.0
    %v38 = vadd.f32 %v34, 0.0
    %v39 = vadd.f32 %v35, 0.0
    %v40 = vadd.f32 %v36, 0.0
    %41 = vxpose.xlu0.b32.start [1/16] %v37, 128
    %42 = vxpose.xlu0.b32.cont [2/16] %v38, 128
    %43 = vxpose.xlu0.b32.cont [3/16] %v39, 128
    %44 = vxpose.xlu0.b32.cont [4/16] %v40, 128
    %45 = vxpose.xlu0.b32.cont [5/16] 0.0, 128
    %46 = vxpose.xlu0.b32.cont [6/16] 0.0, 128
    %47 = vxpose.xlu0.b32.cont [7/16] 0.0, 128
    %48 = vxpose.xlu0.b32.cont [8/16] 0.0, 128
    %49 = vxpose.xlu0.b32.cont [9/16] 0.0, 128
    %50 = vxpose.xlu0.b32.cont [10/16] 0.0, 128
    %51 = vxpose.xlu0.b32.cont [11/16] 0.0, 128
    %52 = vxpose.xlu0.b32.cont [12/16] 0.0, 128
    %53 = vxpose.xlu0.b32.cont [13/16] 0.0, 128
    %54 = vxpose.xlu0.b32.cont [14/16] 0.0, 128
    %55 = vxpose.xlu0.b32.cont [15/16] 0.0, 128
    %56 = vxpose.xlu0.b32.end [16/16] 0.0, 128
    %v57 = vpop.trf.xlu0
    %v58 = vpop.trf.xlu0
    %v59 = vpop.trf.xlu0
    %v60 = vpop.trf.xlu0
    %v61 = vpop.trf.xlu0
    %v62 = vpop.trf.xlu0
    %v63 = vpop.trf.xlu0
    %v64 = vpop.trf.xlu0
    %v65 = vpop.trf.xlu0
    %v66 = vpop.trf.xlu0
    %v67 = vpop.trf.xlu0
    %v68 = vpop.trf.xlu0
    %v69 = vpop.trf.xlu0
    %v70 = vpop.trf.xlu0
    %v71 = vpop.trf.xlu0
    %v72 = vpop.trf.xlu0
    %v73 = vmul.f32 %v57, 0.00390625
    %v74 = vld [vmem:[%s1] sm:$0xff]
    %v75 = vld [vmem:[%s1 + $0x8] sm:$0xff]
    %v76 = vld [vmem:[%s1 + $0x10] sm:$0xff]
    %v77 = vld [vmem:[%s1 + $0x18] sm:$0xff]
    %vm78 = vcmask 261120
    %v80 = vsel %vm78, %v73, 0
    %82 = vmatprep.subr.mxu0 0.0
    %83 = vmatpush1.msra.mxu0 %v74
    %84 = vmatprep.subr.mxu0 0.0
    %85 = vmatpush1.msra.mxu0 %v75
    %86 = vmatprep.subr.mxu0 0.0
    %87 = vmatpush1.msra.mxu0 %v76
    %88 = vmatprep.subr.mxu0 0.0
    %89 = vmatpush1.msra.mxu0 %v77
    %90 = vmatprep.subr.mxu0 0.0
    %91 = vmatpush1.msra.mxu0 0.0
    %92 = vmatprep.subr.mxu0 0.0
    %93 = vmatpush1.msra.mxu0 0.0
    %94 = vmatprep.subr.mxu0 0.0
    %95 = vmatpush1.msra.mxu0 0.0
    %96 = vmatprep.subr.mxu0 0.0
    %97 = vmatpush1.msra.mxu0 0.0
    %98 = vmatprep.subr.mxu0 0.0
    %99 = vmatpush1.msra.mxu0 0.0
    %100 = vmatprep.subr.mxu0 0.0
    %101 = vmatpush1.msra.mxu0 0.0
    %102 = vmatprep.subr.mxu0 0.0
    %103 = vmatpush1.msra.mxu0 0.0
    %104 = vmatprep.subr.mxu0 0.0
    %105 = vmatpush1.msra.mxu0 0.0
    %106 = vmatprep.subr.mxu0 0.0
    %107 = vmatpush1.msra.mxu0 0.0
    %108 = vmatprep.subr.mxu0 0.0
    %109 = vmatpush1.msra.mxu0 0.0
    %110 = vmatprep.subr.mxu0 0.0
    %111 = vmatpush1.msra.mxu0 0.0
    %112 = vmatprep.subr.mxu0 0.0
    %113 = vmatpush1.msra.mxu0 0.0
    %114 = vmatprep.subr.mxu0 0.0
    %115 = vmatpush1.msra.mxu0 0.0
    %116 = vmatprep.subr.mxu0 0.0
    %117 = vmatpush1.msra.mxu0 0.0
    %118 = vmatprep.subr.mxu0 0.0
    %119 = vmatpush1.msra.mxu0 0.0
    %120 = vmatprep.subr.mxu0 0.0
    %121 = vmatpush1.msra.mxu0 0.0
    %122 = vmatprep.subr.mxu0 0.0
    %123 = vmatpush1.msra.mxu0 0.0
    %124 = vmatprep.subr.mxu0 0.0
    %125 = vmatpush1.msra.mxu0 0.0
    %126 = vmatprep.subr.mxu0 0.0
    %127 = vmatpush1.msra.mxu0 0.0
    %128 = vmatprep.subr.mxu0 0.0
    %129 = vmatpush1.msra.mxu0 0.0
    %130 = vmatprep.subr.mxu0 0.0
    %131 = vmatpush1.msra.mxu0 0.0
    %132 = vmatprep.subr.mxu0 0.0
    %133 = vmatpush1.msra.mxu0 0.0
    %134 = vmatprep.subr.mxu0 0.0
    %135 = vmatpush1.msra.mxu0 0.0
    %136 = vmatprep.subr.mxu0 0.0
    %137 = vmatpush1.msra.mxu0 0.0
    %138 = vmatprep.subr.mxu0 0.0
    %139 = vmatpush1.msra.mxu0 0.0
    %140 = vmatprep.subr.mxu0 0.0
    %141 = vmatpush1.msra.mxu0 0.0
    %142 = vmatprep.subr.mxu0 0.0
    %143 = vmatpush1.msra.mxu0 0.0
    %144 = vmatprep.subr.mxu0 0.0
    %145 = vmatpush1.msra.mxu0 0.0
    %146 = vmatprep.mubr.f32.mxu0 0.0
    %147 = vmatmul.mubr.f32.gmra.mrb[0].mxu0 %v80
    %v148 = vpop.f32.mrb[0].mxu0
    %v149 = vadd.f32 0.0, %v148
    %v150 = vpop.f32.mrb[0].mxu0
    %151 = vdwg.mxu0
    %v152 = vld [vmem:[%s2] sm:$0x1]
    %v153 = vld [vmem:[%s3] sm:$0x1]
    %vm154 = vcmask 517120
    %v155 = vsel %vm154, %v149, 0.0
    %v156 = vrot.slane %v155, 4
    %v157 = vadd.f32 %v155, %v156
    %v158 = vrot.slane %v157, 2
    %v159 = vadd.f32 %v157, %v158
    %v160 = vrot.slane %v159, 1
    %v161 = vadd.f32 %v159, %v160
    %v162 = vrcp.pop 2.0
    %v163 = vmul.f32 %v161, %v162
    %v164 = vsub.f32 %v149, %v163
    %v165 = vmul.f32 %v164, %v164
    %v166 = vsel %vm154, %v165, 0.0
    %v167 = vrot.slane %v166, 4
    %v168 = vadd.f32 %v166, %v167
    %v169 = vrot.slane %v168, 2
    %v170 = vadd.f32 %v168, %v169
    %v171 = vrot.slane %v170, 1
    %v172 = vadd.f32 %v170, %v171
    %v173 = vmul.f32 %v172, %v162
    %v174 = vadd.f32 %v173, 1e-05
    %v175 = vrsqrt.pop %v174
    %v176 = vmul.f32 %v164, %v175
    %v178 = vlaneseq
    %v179 = vshrl.u32 %v178, 7
    %v180 = vsub.s32 0, %v179
    %v181 = vrot.slane %v152, %v180
    %v183 = vmul.f32 %v176, %v181
    %v185 = vlaneseq
    %v186 = vshrl.u32 %v185, 7
    %v187 = vsub.s32 0, %v186
    %v188 = vrot.slane %v153, %v187
    %v190 = vadd.f32 %v183, %v188
    %v191 = vmax.f32 %v190, 0.0
    %v192 = vld [vmem:[%s4] sm:$0xff]
    %v193 = vld [vmem:[%s4 + $0x8] sm:$0xff]
    %v194 = vld [vmem:[%s4 + $0x10] sm:$0xff]
    %v195 = vld [vmem:[%s4 + $0x18] sm:$0xff]
    %v196 = vld [vmem:[%s4 + $0x20] sm:$0xff]
    %v197 = vld [vmem:[%s4 + $0x28] sm:$0xff]
    %v198 = vld [vmem:[%s4 + $0x30] sm:$0xff]
    %v199 = vld [vmem:[%s4 + $0x38] sm:$0xff]
    %vm200 = vcmask 523264
    %v202 = vsel %vm200, %v191, 0
    %204 = vmatprep.subr.mxu0 0.0
    %205 = vmatpush1.msra.mxu0 %v192
    %206 = vmatprep.subr.mxu0 0.0
    %207 = vmatpush1.msra.mxu0 %v193
    %208 = vmatprep.subr.mxu0 0.0
    %209 = vmatpush1.msra.mxu0 %v194
    %210 = vmatprep.subr.mxu0 0.0
    %211 = vmatpush1.msra.mxu0 %v195
    %212 = vmatprep.subr.mxu0 0.0
    %213 = vmatpush1.msra.mxu0 %v196
    %214 = vmatprep.subr.mxu0 0.0
    %215 = vmatpush1.msra.mxu0 %v197
    %216 = vmatprep.subr.mxu0 0.0
    %217 = vmatpush1.msra.mxu0 %v198
    %218 = vmatprep.subr.mxu0 0.0
    %219 = vmatpush1.msra.mxu0 %v199
    %220 = vmatprep.subr.mxu0 0.0
    %221 = vmatpush1.msra.mxu0 0.0
    %222 = vmatprep.subr.mxu0 0.0
    %223 = vmatpush1.msra.mxu0 0.0
    %224 = vmatprep.subr.mxu0 0.0
    %225 = vmatpush1.msra.mxu0 0.0
    %226 = vmatprep.subr.mxu0 0.0
    %227 = vmatpush1.msra.mxu0 0.0
    %228 = vmatprep.subr.mxu0 0.0
    %229 = vmatpush1.msra.mxu0 0.0
    %230 = vmatprep.subr.mxu0 0.0
    %231 = vmatpush1.msra.mxu0 0.0
    %232 = vmatprep.subr.mxu0 0.0
    %233 = vmatpush1.msra.mxu0 0.0
    %234 = vmatprep.subr.mxu0 0.0
    %235 = vmatpush1.msra.mxu0 0.0
    %236 = vmatprep.subr.mxu0 0.0
    %237 = vmatpush1.msra.mxu0 0.0
    %238 = vmatprep.subr.mxu0 0.0
    %239 = vmatpush1.msra.mxu0 0.0
    %240 = vmatprep.subr.mxu0 0.0
    %241 = vmatpush1.msra.mxu0 0.0
    %242 = vmatprep.subr.mxu0 0.0
    %243 = vmatpush1.msra.mxu0 0.0
    %244 = vmatprep.subr.mxu0 0.0
    %245 = vmatpush1.msra.mxu0 0.0
    %246 = vmatprep.subr.mxu0 0.0
    %247 = vmatpush1.msra.mxu0 0.0
    %248 = vmatprep.subr.mxu0 0.0
    %249 = vmatpush1.msra.mxu0 0.0
    %250 = vmatprep.subr.mxu0 0.0
    %251 = vmatpush1.msra.mxu0 0.0
    %252 = vmatprep.subr.mxu0 0.0
    %253 = vmatpush1.msra.mxu0 0.0
    %254 = vmatprep.subr.mxu0 0.0
    %255 = vmatpush1.msra.mxu0 0.0
    %256 = vmatprep.subr.mxu0 0.0
    %257 = vmatpush1.msra.mxu0 0.0
    %258 = vmatprep.subr.mxu0 0.0
    %259 = vmatpush1.msra.mxu0 0.0
    %260 = vmatprep.subr.mxu0 0.0
    %261 = vmatpush1.msra.mxu0 0.0
    %262 = vmatprep.subr.mxu0 0.0
    %263 = vmatpush1.msra.mxu0 0.0
    %264 = vmatprep.subr.mxu0 0.0
    %265 = vmatpush1.msra.mxu0 0.0
    %266 = vmatprep.subr.mxu0 0.0
    %267 = vmatpush1.msra.mxu0 0.0
    %268 = vmatprep.mubr.f32.mxu0 0.0
    %269 = vmatmul.mubr.f32.gmra.mrb[0].mxu0 %v202
    %v270 = vpop.f32.mrb[0].mxu0
    %v271 = vadd.f32 0.0, %v270
    %v272 = vpop.f32.mrb[0].mxu0
    %273 = vdwg.mxu0
    %vm274 = vcmask 123904
    %v275 = vsel %vm274, %v271, 0.0
    %v276 = vrot.slane %v275, 4
    %v277 = vadd.f32 %v275, %v276
    %v278 = vrot.slane %v277, 2
    %v279 = vadd.f32 %v277, %v278
    %v280 = vrot.slane %v279, 1
    %v281 = vadd.f32 %v279, %v280
    %v282 = vmul.f32 %v281, %v162
    %v283 = vsub.f32 %v271, %v282
    %v284 = vmul.f32 %v283, %v283
    %v285 = vsel %vm274, %v284, 0.0
    %v286 = vrot.slane %v285, 4
    %v287 = vadd.f32 %v285, %v286
    %v288 = vrot.slane %v287, 2
    %v289 = vadd.f32 %v287, %v288
    %v290 = vrot.slane %v289, 1
    %v291 = vadd.f32 %v289, %v290
    %v292 = vmul.f32 %v291, %v162
    %v293 = vadd.f32 %v292, 1e-05
    %v294 = vrsqrt.pop %v293
    %v295 = vmul.f32 %v283, %v294
    %v296 = vld [vmem:[%s5] sm:$0xff]
    %v297 = vld [vmem:[%s5 + $0x8] sm:$0xff]
    %vm298 = vcmask 130048
    %v300 = vsel %vm298, %v295, 0
    %302 = vmatprep.subr.mxu0 0.0
    %303 = vmatpush1.msra.mxu0 %v296
    %304 = vmatprep.subr.mxu0 0.0
    %305 = vmatpush1.msra.mxu0 %v297
    %306 = vmatprep.subr.mxu0 0.0
    %307 = vmatpush1.msra.mxu0 0.0
    %308 = vmatprep.subr.mxu0 0.0
    %309 = vmatpush1.msra.mxu0 0.0
    %310 = vmatprep.subr.mxu0 0.0
    %311 = vmatpush1.msra.mxu0 0.0
    %312 = vmatprep.subr.mxu0 0.0
    %313 = vmatpush1.msra.mxu0 0.0
    %314 = vmatprep.subr.mxu0 0.0
    %315 = vmatpush1.msra.mxu0 0.0
    %316 = vmatprep.subr.mxu0 0.0
    %317 = vmatpush1.msra.mxu0 0.0
    %318 = vmatprep.subr.mxu0 0.0
    %319 = vmatpush1.msra.mxu0 0.0
    %320 = vmatprep.subr.mxu0 0.0
    %321 = vmatpush1.msra.mxu0 0.0
    %322 = vmatprep.subr.mxu0 0.0
    %323 = vmatpush1.msra.mxu0 0.0
    %324 = vmatprep.subr.mxu0 0.0
    %325 = vmatpush1.msra.mxu0 0.0
    %326 = vmatprep.subr.mxu0 0.0
    %327 = vmatpush1.msra.mxu0 0.0
    %328 = vmatprep.subr.mxu0 0.0
    %329 = vmatpush1.msra.mxu0 0.0
    %330 = vmatprep.subr.mxu0 0.0
    %331 = vmatpush1.msra.mxu0 0.0
    %332 = vmatprep.subr.mxu0 0.0
    %333 = vmatpush1.msra.mxu0 0.0
    %334 = vmatprep.subr.mxu0 0.0
    %335 = vmatpush1.msra.mxu0 0.0
    %336 = vmatprep.subr.mxu0 0.0
    %337 = vmatpush1.msra.mxu0 0.0
    %338 = vmatprep.subr.mxu0 0.0
    %339 = vmatpush1.msra.mxu0 0.0
    %340 = vmatprep.subr.mxu0 0.0
    %341 = vmatpush1.msra.mxu0 0.0
    %342 = vmatprep.subr.mxu0 0.0
    %343 = vmatpush1.msra.mxu0 0.0
    %344 = vmatprep.subr.mxu0 0.0
    %345 = vmatpush1.msra.mxu0 0.0
    %346 = vmatprep.subr.mxu0 0.0
    %347 = vmatpush1.msra.mxu0 0.0
    %348 = vmatprep.subr.mxu0 0.0
    %349 = vmatpush1.msra.mxu0 0.0
    %350 = vmatprep.subr.mxu0 0.0
    %351 = vmatpush1.msra.mxu0 0.0
    %352 = vmatprep.subr.mxu0 0.0
    %353 = vmatpush1.msra.mxu0 0.0
    %354 = vmatprep.subr.mxu0 0.0
    %355 = vmatpush1.msra.mxu0 0.0
    %356 = vmatprep.subr.mxu0 0.0
    %357 = vmatpush1.msra.mxu0 0.0
    %358 = vmatprep.subr.mxu0 0.0
    %359 = vmatpush1.msra.mxu0 0.0
    %360 = vmatprep.subr.mxu0 0.0
    %361 = vmatpush1.msra.mxu0 0.0
    %362 = vmatprep.subr.mxu0 0.0
    %363 = vmatpush1.msra.mxu0 0.0
    %364 = vmatprep.subr.mxu0 0.0
    %365 = vmatpush1.msra.mxu0 0.0
    %366 = vmatprep.mubr.f32.mxu0 0.0
    %367 = vmatmul.mubr.f32.gmra.mrb[0].mxu0 %v300
    %v368 = vpop.f32.mrb[0].mxu0
    %v369 = vadd.f32 0.0, %v368
    %v370 = vpop.f32.mrb[0].mxu0
    %371 = vdwg.mxu0
    %v372 = vld [vmem:[%s6] sm:$0x1]
    %v373 = vld [vmem:[%s7] sm:$0x1]
    %v374 = vsel %vm154, %v369, 0.0
    %v375 = vrot.slane %v374, 4
    %v376 = vadd.f32 %v374, %v375
    %v377 = vrot.slane %v376, 2
    %v378 = vadd.f32 %v376, %v377
    %v379 = vrot.slane %v378, 1
    %v380 = vadd.f32 %v378, %v379
    %v381 = vmul.f32 %v380, %v162
    %v382 = vsub.f32 %v369, %v381
    %v383 = vmul.f32 %v382, %v382
    %v384 = vsel %vm154, %v383, 0.0
    %v385 = vrot.slane %v384, 4
    %v386 = vadd.f32 %v384, %v385
    %v387 = vrot.slane %v386, 2
    %v388 = vadd.f32 %v386, %v387
    %v389 = vrot.slane %v388, 1
    %v390 = vadd.f32 %v388, %v389
    %v391 = vmul.f32 %v390, %v162
    %v392 = vadd.f32 %v391, 1e-05
    %v393 = vrsqrt.pop %v392
    %v394 = vmul.f32 %v382, %v393
    %v396 = vlaneseq
    %v397 = vshrl.u32 %v396, 7
    %v398 = vsub.s32 0, %v397
    %v399 = vrot.slane %v372, %v398
    %v401 = vmul.f32 %v394, %v399
    %v403 = vlaneseq
    %v404 = vshrl.u32 %v403, 7
    %v405 = vsub.s32 0, %v404
    %v406 = vrot.slane %v373, %v405
    %v408 = vadd.f32 %v401, %v406
    %v409 = vmax.f32 %v408, 0.0
    %v410 = vld [vmem:[%s8] sm:$0xff]
    %v411 = vld [vmem:[%s8 + $0x8] sm:$0xff]
    %v412 = vld [vmem:[%s8 + $0x10] sm:$0xff]
    %v413 = vld [vmem:[%s8 + $0x18] sm:$0xff]
    %v414 = vld [vmem:[%s8 + $0x20] sm:$0xff]
    %v415 = vld [vmem:[%s8 + $0x28] sm:$0xff]
    %v416 = vld [vmem:[%s8 + $0x30] sm:$0xff]
    %v417 = vld [vmem:[%s8 + $0x38] sm:$0xff]
    %v419 = vsel %vm200, %v409, 0
    %421 = vmatprep.subr.mxu0 0.0
    %422 = vmatpush1.msra.mxu0 %v410
    %423 = vmatprep.subr.mxu0 0.0
    %424 = vmatpush1.msra.mxu0 %v411
    %425 = vmatprep.subr.mxu0 0.0
    %426 = vmatpush1.msra.mxu0 %v412
    %427 = vmatprep.subr.mxu0 0.0
    %428 = vmatpush1.msra.mxu0 %v413
    %429 = vmatprep.subr.mxu0 0.0
    %430 = vmatpush1.msra.mxu0 %v414
    %431 = vmatprep.subr.mxu0 0.0
    %432 = vmatpush1.msra.mxu0 %v415
    %433 = vmatprep.subr.mxu0 0.0
    %434 = vmatpush1.msra.mxu0 %v416
    %435 = vmatprep.subr.mxu0 0.0
    %436 = vmatpush1.msra.mxu0 %v417
    %437 = vmatprep.subr.mxu0 0.0
    %438 = vmatpush1.msra.mxu0 0.0
    %439 = vmatprep.subr.mxu0 0.0
    %440 = vmatpush1.msra.mxu0 0.0
    %441 = vmatprep.subr.mxu0 0.0
    %442 = vmatpush1.msra.mxu0 0.0
    %443 = vmatprep.subr.mxu0 0.0
    %444 = vmatpush1.msra.mxu0 0.0
    %445 = vmatprep.subr.mxu0 0.0
    %446 = vmatpush1.msra.mxu0 0.0
    %447 = vmatprep.subr.mxu0 0.0
    %448 = vmatpush1.msra.mxu0 0.0
    %449 = vmatprep.subr.mxu0 0.0
    %450 = vmatpush1.msra.mxu0 0.0
    %451 = vmatprep.subr.mxu0 0.0
    %452 = vmatpush1.msra.mxu0 0.0
    %453 = vmatprep.subr.mxu0 0.0
    %454 = vmatpush1.msra.mxu0 0.0
    %455 = vmatprep.subr.mxu0 0.0
    %456 = vmatpush1.msra.mxu0 0.0
    %457 = vmatprep.subr.mxu0 0.0
    %458 = vmatpush1.msra.mxu0 0.0
    %459 = vmatprep.subr.mxu0 0.0
    %460 = vmatpush1.msra.mxu0 0.0
    %461 = vmatprep.subr.mxu0 0.0
    %462 = vmatpush1.msra.mxu0 0.0
    %463 = vmatprep.subr.mxu0 0.0
    %464 = vmatpush1.msra.mxu0 0.0
    %465 = vmatprep.subr.mxu0 0.0
    %466 = vmatpush1.msra.mxu0 0.0
    %467 = vmatprep.subr.mxu0 0.0
    %468 = vmatpush1.msra.mxu0 0.0
    %469 = vmatprep.subr.mxu0 0.0
    %470 = vmatpush1.msra.mxu0 0.0
    %471 = vmatprep.subr.mxu0 0.0
    %472 = vmatpush1.msra.mxu0 0.0
    %473 = vmatprep.subr.mxu0 0.0
    %474 = vmatpush1.msra.mxu0 0.0
    %475 = vmatprep.subr.mxu0 0.0
    %476 = vmatpush1.msra.mxu0 0.0
    %477 = vmatprep.subr.mxu0 0.0
    %478 = vmatpush1.msra.mxu0 0.0
    %479 = vmatprep.subr.mxu0 0.0
    %480 = vmatpush1.msra.mxu0 0.0
    %481 = vmatprep.subr.mxu0 0.0
    %482 = vmatpush1.msra.mxu0 0.0
    %483 = vmatprep.subr.mxu0 0.0
    %484 = vmatpush1.msra.mxu0 0.0
    %485 = vmatprep.mubr.f32.mxu0 0.0
    %486 = vmatmul.mubr.f32.gmra.mrb[0].mxu0 %v419
    %v487 = vpop.f32.mrb[0].mxu0
    %v488 = vadd.f32 0.0, %v487
    %v489 = vpop.f32.mrb[0].mxu0
    %490 = vdwg.mxu0
    %491 = vst.msk [vmem:[#allocation2] sm:$0x3] %vm274, %v488
    // Predicated region
    $region38: #{moco_v3_inference.3} parent=1 // pred_check
      _
    $region39: #{moco_v3_inference.3} parent=1 // pred_check_branch
      %493 = sbr.rel (0) target = $region41
    $region40: #{moco_v3_inference.3} parent=1 // pred_region
      %s495 = ssub.s32 32, 32
      %496 = vsyncadd [#allocation3], %s495
      %s498 = sshll.u32 [#allocation2], 4
      %s499 = int_to_ptr.vmem [resolvable:$true] %s498
      %501 = dma.vmem_to_hbm [thread:$0]  %s499, 32, %s9, [#allocation3]
    $region41: #{moco_v3_inference.3} parent=1 // pred_fallthru
      _
    // Predicated region
    $region42: #{moco_v3_inference.3} parent=1 // pred_check
      _
    $region43: #{moco_v3_inference.3} parent=1 // pred_check_branch
      %503 = sbr.rel (0) target = $region45
    $region44: #{moco_v3_inference.3} parent=1 // pred_region
      %504 = dma.done [#allocation3], 32
    $region45: #{moco_v3_inference.3} parent=1 // pred_fallthru
      _
    %505 = vsyncpa [#allocation3], 1

// kernel: moco_v3_inference.2
$region0: #{moco_v3_inference.2}
  #allocation0 [shape = 'u32[]', space=smem, size = 0x4, offset = 0x4, fixed_abs, tag = 'smem constant byte address 0x4 - core index']
  #allocation1 [shape = 'u32[144,128]{1,0:T(1,128)}', space=vmem, size = 0x12000, scoped, tag = 'internal scratch']
  %s0 = inlined_call_operand.vmem [shape: f32[8,256], index: 0, kind: input, shape index: {}]
  %s1 = inlined_call_operand.vmem [shape: f32[32,4], index: 1, kind: input, shape index: {}]
  %s2 = inlined_call_operand.vmem [shape: f32[1,32,2], index: 2, kind: output, shape index: {}]
  %s3 = sld [smem:[#allocation0]]
  $region22: #{moco_v3_inference.2} parent=0
    _
  %s5 = ssub.s32 1, %s3
  %s6 = scalar_select 0, %s5, %s3
  // Predicated region
  $region2: #{moco_v3_inference.2} parent=0 // pred_check
    _
  $region3: #{moco_v3_inference.2} parent=0 // pred_check_branch
    %8 = sbr.rel (0) target = $region5
  $region4: #{moco_v3_inference.2} parent=0 // pred_region
    %s9 = sadd.s32 0, 0
    %p10 = scmp.lt.s32.totalorder %s9, 0
    %s11 = scalar_select %p10, %s9, 0
    %s12 = smul.u32 2, %s11
    %p13 = scmp.lt.s32.totalorder %s12, 1
    %s14 = scalar_select %p13, %s12, 1
    %s15 = smul.addr %s14, 8
    %s16 = scalar_lea.vmem %s0, %s15
    %s17 = sadd.s32 0, 0
    %p18 = scmp.lt.s32.totalorder %s17, 0
    %s19 = scalar_select %p18, %s17, 0
    %s20 = smul.u32 2, %s19
  $region5: #{moco_v3_inference.2} parent=0 // pred_fallthru
    _
  // Predicated region
  $region6: #{moco_v3_inference.2} parent=0 // pred_check
    _
  $region7: #{moco_v3_inference.2} parent=0 // pred_check_branch
    %22 = sbr.rel (0) target = $region9
  $region8: #{moco_v3_inference.2} parent=0 // pred_region
    _
  $region9: #{moco_v3_inference.2} parent=0 // pred_fallthru
    _
  %s23 = sadd.s32 0, 0
  %p24 = scmp.lt.s32.totalorder %s23, 0
  %s25 = scalar_select %p24, %s23, 0
  %s26 = smul.u32 2, %s25
  %p27 = scmp.lt.s32.totalorder %s26, 1
  %s28 = scalar_select %p27, %s26, 1
  %s29 = smul.addr %s28, 8
  %s30 = scalar_lea.vmem %s0, %s29
  %s31 = sadd.s32 0, 0
  %p32 = scmp.lt.s32.totalorder %s31, 0
  %s33 = scalar_select %p32, %s31, 0
  %s34 = smul.u32 2, %s33
  %p35 = scmp.lt.s32.totalorder %s34, 1
  %s36 = scalar_select %p35, %s34, 1
  %s37 = smul.addr %s36, 8
  %s38 = scalar_lea.vmem %s0, %s37
  %s39 = sadd.s32 0, 0
  %p40 = scmp.lt.s32.totalorder %s39, 0
  %s41 = scalar_select %p40, %s39, 0
  %s42 = smul.u32 2, %s41
  %p43 = scmp.eq.s32.totalorder 0, 0
  // Predicated region
  $region10: #{moco_v3_inference.2} parent=0 // pred_check
    %p44 = pneg %p43
  $region11: #{moco_v3_inference.2} parent=0 // pred_check_branch
    %46 = sbr.rel (%p44) target = $region13
  $region12: #{moco_v3_inference.2} parent=0 // pred_region
    %vm47 = vcmask 15360
    %48 = vst.msk [vmem:[%s2] sm:$0xff] %vm47, 0.0
    %49 = vst.msk [vmem:[%s2 + $0x8] sm:$0xff] %vm47, 0.0
    %50 = vst.msk [vmem:[%s2 + $0x10] sm:$0xff] %vm47, 0.0
    %51 = vst.msk [vmem:[%s2 + $0x18] sm:$0xff] %vm47, 0.0
  $region13: #{moco_v3_inference.2} parent=0 // pred_fallthru
    _
  %v52 = vld [vmem:[%s1] sm:$0xff]
  %v53 = vld [vmem:[%s1 + $0x8] sm:$0xff]
  %v54 = vld [vmem:[%s1 + $0x10] sm:$0xff]
  %v55 = vld [vmem:[%s1 + $0x18] sm:$0xff]
  %v56 = vlaneseq
  %v57 = vand.u32 %v56, 127
  %vm58 = vcmp.eq.s32.totalorder %v57, 0
  %vm59 = vcmp.eq.s32.totalorder %v57, 1
  %v60 = vld [vmem:[%s38] sm:$0xf]
  %v61 = vld [vmem:[%s38 + $0x8] sm:$0xf]
  %vm62 = vcmask 31744
  %v64 = vsel %vm62, %v52, 0
  %v67 = vsel %vm62, %v53, 0
  %v70 = vsel %vm62, %v54, 0
  %v73 = vsel %vm62, %v55, 0
  %vm75 = vcmask 1043456
  %v77 = vsel %vm75, %v60, 0
  %v80 = vsel %vm75, %v61, 0
  %82 = vmatprep.subr.mxu0 %v80
  %83 = vmatpush1.msra.mxu0 %v77
  %84 = vmatprep.subr.mxu0 0.0
  %85 = vmatpush1.msra.mxu0 0.0
  %86 = vmatprep.subr.mxu0 0.0
  %87 = vmatpush1.msra.mxu0 0.0
  %88 = vmatprep.subr.mxu0 0.0
  %89 = vmatpush1.msra.mxu0 0.0
  %90 = vmatprep.subr.mxu0 0.0
  %91 = vmatpush1.msra.mxu0 0.0
  %92 = vmatprep.subr.mxu0 0.0
  %93 = vmatpush1.msra.mxu0 0.0
  %94 = vmatprep.subr.mxu0 0.0
  %95 = vmatpush1.msra.mxu0 0.0
  %96 = vmatprep.subr.mxu0 0.0
  %97 = vmatpush1.msra.mxu0 0.0
  %98 = vmatprep.subr.mxu0 0.0
  %99 = vmatpush1.msra.mxu0 0.0
  %100 = vmatprep.subr.mxu0 0.0
  %101 = vmatpush1.msra.mxu0 0.0
  %102 = vmatprep.subr.mxu0 0.0
  %103 = vmatpush1.msra.mxu0 0.0
  %104 = vmatprep.subr.mxu0 0.0
  %105 = vmatpush1.msra.mxu0 0.0
  %106 = vmatprep.subr.mxu0 0.0
  %107 = vmatpush1.msra.mxu0 0.0
  %108 = vmatprep.subr.mxu0 0.0
  %109 = vmatpush1.msra.mxu0 0.0
  %110 = vmatprep.subr.mxu0 0.0
  %111 = vmatpush1.msra.mxu0 0.0
  %112 = vmatprep.subr.mxu0 0.0
  %113 = vmatpush1.msra.mxu0 0.0
  %114 = vmatprep.subr.mxu0 0.0
  %115 = vmatpush1.msra.mxu0 0.0
  %116 = vmatprep.subr.mxu0 0.0
  %117 = vmatpush1.msra.mxu0 0.0
  %118 = vmatprep.subr.mxu0 0.0
  %119 = vmatpush1.msra.mxu0 0.0
  %120 = vmatprep.subr.mxu0 0.0
  %121 = vmatpush1.msra.mxu0 0.0
  %122 = vmatprep.subr.mxu0 0.0
  %123 = vmatpush1.msra.mxu0 0.0
  %124 = vmatprep.subr.mxu0 0.0
  %125 = vmatpush1.msra.mxu0 0.0
  %126 = vmatprep.subr.mxu0 0.0
  %127 = vmatpush1.msra.mxu0 0.0
  %128 = vmatprep.subr.mxu0 0.0
  %129 = vmatpush1.msra.mxu0 0.0
  %130 = vmatprep.subr.mxu0 0.0
  %131 = vmatpush1.msra.mxu0 0.0
  %132 = vmatprep.subr.mxu0 0.0
  %133 = vmatpush1.msra.mxu0 0.0
  %134 = vmatprep.subr.mxu0 0.0
  %135 = vmatpush1.msra.mxu0 0.0
  %136 = vmatprep.subr.mxu0 0.0
  %137 = vmatpush1.msra.mxu0 0.0
  %138 = vmatprep.subr.mxu0 0.0
  %139 = vmatpush1.msra.mxu0 0.0
  %140 = vmatprep.subr.mxu0 0.0
  %141 = vmatpush1.msra.mxu0 0.0
  %142 = vmatprep.subr.mxu0 0.0
  %143 = vmatpush1.msra.mxu0 0.0
  %144 = vmatprep.subr.mxu0 0.0
  %145 = vmatpush1.msra.mxu0 0.0
  %146 = vmatprep.mubr.f32.mxu0 0.0
  %147 = vmatmul.mubr.f32.gmra.mrb[0].mxu0 %v64
  %v148 = vpop.f32.mrb[0].mxu0
  %v149 = vadd.f32 0.0, %v148
  %v150 = vpop.f32.mrb[0].mxu0
  %v151 = vadd.f32 0.0, %v150
  %152 = vmatprep.mubr.f32.mxu0 0.0
  %153 = vmatmul.mubr.f32.gmra.mrb[0].mxu0 %v67
  %v154 = vpop.f32.mrb[0].mxu0
  %v155 = vadd.f32 0.0, %v154
  %v156 = vpop.f32.mrb[0].mxu0
  %v157 = vadd.f32 0.0, %v156
  %158 = vmatprep.mubr.f32.mxu0 0.0
  %159 = vmatmul.mubr.f32.gmra.mrb[0].mxu0 %v70
  %v160 = vpop.f32.mrb[0].mxu0
  %v161 = vadd.f32 0.0, %v160
  %v162 = vpop.f32.mrb[0].mxu0
  %v163 = vadd.f32 0.0, %v162
  %164 = vmatprep.mubr.f32.mxu0 0.0
  %165 = vmatmul.mubr.f32.gmra.mrb[0].mxu0 %v73
  %v166 = vpop.f32.mrb[0].mxu0
  %v167 = vadd.f32 0.0, %v166
  %v168 = vpop.f32.mrb[0].mxu0
  %v169 = vadd.f32 0.0, %v168
  %170 = vdwg.mxu0
  %v171 = vmax.f32 %v149, 0.0
  %v172 = vmax.f32 %v151, 0.0
  %v173 = vmax.f32 %v155, 0.0
  %v174 = vmax.f32 %v157, 0.0
  %v175 = vmax.f32 %v161, 0.0
  %v176 = vmax.f32 %v163, 0.0
  %v177 = vmax.f32 %v167, 0.0
  %v178 = vmax.f32 %v169, 0.0
  %v179 = vadd.f32 %v171, %v172
  %180 = vadd.xlane.f32.xlu0 %v179
  %v181 = vpop.xlane.xlu0 %180
  %v182 = vadd.f32 %v173, %v174
  %183 = vadd.xlane.f32.xlu0 %v182
  %v184 = vpop.xlane.xlu0 %183
  %v185 = vadd.f32 %v175, %v176
  %186 = vadd.xlane.f32.xlu0 %v185
  %v187 = vpop.xlane.xlu0 %186
  %v188 = vadd.f32 %v177, %v178
  %189 = vadd.xlane.f32.xlu0 %v188
  %v190 = vpop.xlane.xlu0 %189
  %v191 = vsel %vm58, %v181, 0.0
  %v192 = vsel %vm58, %v184, 0.0
  %v193 = vsel %vm58, %v187, 0.0
  %v194 = vsel %vm58, %v190, 0.0
  %v195 = vadd.f32 %v191, 0.0
  %v196 = vadd.f32 %v192, 0.0
  %v197 = vadd.f32 %v193, 0.0
  %v198 = vadd.f32 %v194, 0.0
  %v199 = vld [vmem:[%s38] sm:$0xf0]
  %v200 = vld [vmem:[%s38 + $0x8] sm:$0xf0]
  %v203 = vrot.slane %v199, 4
  %v204 = vrot.slane %v200, 4
  %v205 = vsel %vm75, %v203, 0
  %v207 = vsel %vm75, %v204, 0
  %209 = vmatprep.subr.mxu0 %v207
  %210 = vmatpush1.msra.mxu0 %v205
  %211 = vmatprep.subr.mxu0 0.0
  %212 = vmatpush1.msra.mxu0 0.0
  %213 = vmatprep.subr.mxu0 0.0
  %214 = vmatpush1.msra.mxu0 0.0
  %215 = vmatprep.subr.mxu0 0.0
  %216 = vmatpush1.msra.mxu0 0.0
  %217 = vmatprep.subr.mxu0 0.0
  %218 = vmatpush1.msra.mxu0 0.0
  %219 = vmatprep.subr.mxu0 0.0
  %220 = vmatpush1.msra.mxu0 0.0
  %221 = vmatprep.subr.mxu0 0.0
  %222 = vmatpush1.msra.mxu0 0.0
  %223 = vmatprep.subr.mxu0 0.0
  %224 = vmatpush1.msra.mxu0 0.0
  %225 = vmatprep.subr.mxu0 0.0
  %226 = vmatpush1.msra.mxu0 0.0
  %227 = vmatprep.subr.mxu0 0.0
  %228 = vmatpush1.msra.mxu0 0.0
  %229 = vmatprep.subr.mxu0 0.0
  %230 = vmatpush1.msra.mxu0 0.0
  %231 = vmatprep.subr.mxu0 0.0
  %232 = vmatpush1.msra.mxu0 0.0
  %233 = vmatprep.subr.mxu0 0.0
  %234 = vmatpush1.msra.mxu0 0.0
  %235 = vmatprep.subr.mxu0 0.0
  %236 = vmatpush1.msra.mxu0 0.0
  %237 = vmatprep.subr.mxu0 0.0
  %238 = vmatpush1.msra.mxu0 0.0
  %239 = vmatprep.subr.mxu0 0.0
  %240 = vmatpush1.msra.mxu0 0.0
  %241 = vmatprep.subr.mxu0 0.0
  %242 = vmatpush1.msra.mxu0 0.0
  %243 = vmatprep.subr.mxu0 0.0
  %244 = vmatpush1.msra.mxu0 0.0
  %245 = vmatprep.subr.mxu0 0.0
  %246 = vmatpush1.msra.mxu0 0.0
  %247 = vmatprep.subr.mxu0 0.0
  %248 = vmatpush1.msra.mxu0 0.0
  %249 = vmatprep.subr.mxu0 0.0
  %250 = vmatpush1.msra.mxu0 0.0
  %251 = vmatprep.subr.mxu0 0.0
  %252 = vmatpush1.msra.mxu0 0.0
  %253 = vmatprep.subr.mxu0 0.0
  %254 = vmatpush1.msra.mxu0 0.0
  %255 = vmatprep.subr.mxu0 0.0
  %256 = vmatpush1.msra.mxu0 0.0
  %257 = vmatprep.subr.mxu0 0.0
  %258 = vmatpush1.msra.mxu0 0.0
  %259 = vmatprep.subr.mxu0 0.0
  %260 = vmatpush1.msra.mxu0 0.0
  %261 = vmatprep.subr.mxu0 0.0
  %262 = vmatpush1.msra.mxu0 0.0
  %263 = vmatprep.subr.mxu0 0.0
  %264 = vmatpush1.msra.mxu0 0.0
  %265 = vmatprep.subr.mxu0 0.0
  %266 = vmatpush1.msra.mxu0 0.0
  %267 = vmatprep.subr.mxu0 0.0
  %268 = vmatpush1.msra.mxu0 0.0
  %269 = vmatprep.subr.mxu0 0.0
  %270 = vmatpush1.msra.mxu0 0.0
  %271 = vmatprep.subr.mxu0 0.0
  %272 = vmatpush1.msra.mxu0 0.0
  %273 = vmatprep.mubr.f32.mxu0 0.0
  %274 = vmatmul.mubr.f32.gmra.mrb[0].mxu0 %v64
  %v275 = vpop.f32.mrb[0].mxu0
  %v276 = vadd.f32 0.0, %v275
  %v277 = vpop.f32.mrb[0].mxu0
  %v278 = vadd.f32 0.0, %v277
  %279 = vmatprep.mubr.f32.mxu0 0.0
  %280 = vmatmul.mubr.f32.gmra.mrb[0].mxu0 %v67
  %v281 = vpop.f32.mrb[0].mxu0
  %v282 = vadd.f32 0.0, %v281
  %v283 = vpop.f32.mrb[0].mxu0
  %v284 = vadd.f32 0.0, %v283
  %285 = vmatprep.mubr.f32.mxu0 0.0
  %286 = vmatmul.mubr.f32.gmra.mrb[0].mxu0 %v70
  %v287 = vpop.f32.mrb[0].mxu0
  %v288 = vadd.f32 0.0, %v287
  %v289 = vpop.f32.mrb[0].mxu0
  %v290 = vadd.f32 0.0, %v289
  %291 = vmatprep.mubr.f32.mxu0 0.0
  %292 = vmatmul.mubr.f32.gmra.mrb[0].mxu0 %v73
  %v293 = vpop.f32.mrb[0].mxu0
  %v294 = vadd.f32 0.0, %v293
  %v295 = vpop.f32.mrb[0].mxu0
  %v296 = vadd.f32 0.0, %v295
  %297 = vdwg.mxu0
  %v298 = vmax.f32 %v276, 0.0
  %v299 = vmax.f32 %v278, 0.0
  %v300 = vmax.f32 %v282, 0.0
  %v301 = vmax.f32 %v284, 0.0
  %v302 = vmax.f32 %v288, 0.0
  %v303 = vmax.f32 %v290, 0.0
  %v304 = vmax.f32 %v294, 0.0
  %v305 = vmax.f32 %v296, 0.0
  %v306 = vadd.f32 %v298, %v299
  %307 = vadd.xlane.f32.xlu0 %v306
  %v308 = vpop.xlane.xlu0 %307
  %v309 = vadd.f32 %v300, %v301
  %310 = vadd.xlane.f32.xlu0 %v309
  %v311 = vpop.xlane.xlu0 %310
  %v312 = vadd.f32 %v302, %v303
  %313 = vadd.xlane.f32.xlu0 %v312
  %v314 = vpop.xlane.xlu0 %313
  %v315 = vadd.f32 %v304, %v305
  %316 = vadd.xlane.f32.xlu0 %v315
  %v317 = vpop.xlane.xlu0 %316
  %v318 = vsel %vm59, %v308, 0.0
  %v319 = vsel %vm59, %v311, 0.0
  %v320 = vsel %vm59, %v314, 0.0
  %v321 = vsel %vm59, %v317, 0.0
  %v322 = vadd.f32 %v195, %v318
  %v323 = vadd.f32 %v196, %v319
  %v324 = vadd.f32 %v197, %v320
  %v325 = vadd.f32 %v198, %v321
  %v326 = vld [vmem:[%s2] sm:$0xff]
  %v327 = vld [vmem:[%s2 + $0x8] sm:$0xff]
  %v328 = vld [vmem:[%s2 + $0x10] sm:$0xff]
  %v329 = vld [vmem:[%s2 + $0x18] sm:$0xff]
  %v330 = vadd.f32 %v326, %v322
  %v331 = vadd.f32 %v327, %v323
  %v332 = vadd.f32 %v328, %v324
  %v333 = vadd.f32 %v329, %v325
  %vm334 = vcmask 15360
  %335 = vst.msk [vmem:[%s2] sm:$0xff] %vm334, %v330
  %336 = vst.msk [vmem:[%s2 + $0x8] sm:$0xff] %vm334, %v331
  %337 = vst.msk [vmem:[%s2 + $0x10] sm:$0xff] %vm334, %v332
  %338 = vst.msk [vmem:[%s2 + $0x18] sm:$0xff] %vm334, %v333
  // Predicated region
  $region14: #{moco_v3_inference.2} parent=0 // pred_check
    _
  $region15: #{moco_v3_inference.2} parent=0 // pred_check_branch
    %340 = sbr.rel (0) target = $region17
  $region16: #{moco_v3_inference.2} parent=0 // pred_region
    _
  $region17: #{moco_v3_inference.2} parent=0 // pred_fallthru
    _
  // Predicated region
  $region18: #{moco_v3_inference.2} parent=0 // pred_check
    _
  $region19: #{moco_v3_inference.2} parent=0 // pred_check_branch
    %342 = sbr.rel (0) target = $region21
  $region20: #{moco_v3_inference.2} parent=0 // pred_region
    _
  $region21: #{moco_v3_inference.2} parent=0 // pred_fallthru
    _

</llo_original>
